<compile_context>
chip_gen: v6e
topology: v6e:2x2x1
jax: 0.10.0
libtpu: 0.0.40
codegen_flags: <defaults>
</compile_context>

<pallas_src>
import functools

import jax
import jax.numpy as jnp
import numpy as np
from jax.experimental import pallas as pl
from jax.experimental.pallas import tpu as pltpu


def _int_power(x, n):
    """x**n for a static positive integer n via square-and-multiply (VPU only)."""
    result = None
    base = x
    while n > 0:
        if n & 1:
            result = base if result is None else result * base
        n >>= 1
        if n:
            base = base * base
    return result


def gem_kernel(x_ref, o_ref, *, p, inv_p, eps, inv_hw, p_int):
    """One row tile of GeM pooling.

    x_ref : (TR, HW) block  (rows = flattened N*C on sublanes, lanes = H*W)
    o_ref : (TR, 1)  block
    """
    x = x_ref[...].astype(jnp.float32)        # bf16 inputs upcast in-kernel (free vs HBM)
    xc = jnp.maximum(x, eps)                  # clamp(min=eps)                 (VPU)
    if p_int is not None:
        xp = _int_power(xc, p_int)            # exact multiply chain           (VPU)
    else:
        xp = jnp.exp(p * jnp.log(xc))         # generic non-integer p          (EUP)
    # Mean over the spatial (lane) axis -> one cross-lane XLU reduce per tile.
    m = jnp.sum(xp, axis=-1, keepdims=True) * inv_hw          # (TR, 1)
    if p == 1.0:
        root = m
    else:
        # Only TR elements -> EUP cost negligible.  m >= eps^p > 0, so log is safe.
        root = jnp.exp(inv_p * jnp.log(m))
    o_ref[...] = root.astype(o_ref.dtype)


def _choose_row_tile(R, HW, itemsize, sub):
    """~2 MiB blocks, multiple of `sub` sublanes; >=2 tiles when R allows (v7x 2 TCs)."""
    bytes_per_row = max(HW * itemsize, 1)
    target_bytes = 2 * 1024 * 1024     # big enough to amortize per-step overhead,
                                       # small enough to double-buffer on every chip
    rt = max(sub, (target_bytes // bytes_per_row) // sub * sub)
    if rt >= R:
        if R >= 2 * sub:
            # Split small inputs in two so both v7x TensorCores get work.
            half = (((R + 1) // 2) + sub - 1) // sub * sub
            if half < R:
                return half
        return R                       # single full-extent tile (always a legal block)
    return rt


def gem_pallas(x, p=3.0, eps=1e-6):
    """GeM pooling: x (N, C, H, W) -> (N, C, 1, 1), matching torch GeM.forward."""
    N, C, H, W = x.shape
    R, HW = N * C, H * W

    if x.dtype not in (jnp.float32, jnp.bfloat16):
        x = x.astype(jnp.float32)
    x2 = x.reshape(R, HW)              # contiguous -> free reshape, no extra HBM pass

    sub = 16 if x2.dtype == jnp.bfloat16 else 8
    row_tile = _choose_row_tile(R, HW, x2.dtype.itemsize, sub)
    n_tiles = pl.cdiv(R, row_tile)

    p = float(p)
    p_round = round(p)
    p_int = int(p_round) if (abs(p - p_round) < 1e-12 and 1 <= p_round <= 64) else None

    kernel = functools.partial(
        gem_kernel,
        p=p, inv_p=1.0 / p, eps=float(eps), inv_hw=1.0 / float(HW), p_int=p_int,
    )
    # NOTE: p/eps are compile-time constants (module default p_trainable=False).
    # TODO(synk): if p becomes trainable, pass p / 1/p as SMEM scalars instead of
    # baking them in, to avoid a Mosaic recompile per value.
    # TODO(synk): for very large H*W (>= ~16K) add a second "arbitrary" grid axis
    # chunking HW with a (row_tile, 1) VMEM accumulator instead of one giant block.

    out = pl.pallas_call(
        kernel,
        out_shape=jax.ShapeDtypeStruct((R, 1), x2.dtype),
        grid_spec=pltpu.PrefetchScalarGridSpec(
            num_scalar_prefetch=0,
            grid=(n_tiles,),
            in_specs=[pl.BlockSpec((row_tile, HW), lambda i: (i, 0))],
            out_specs=pl.BlockSpec((row_tile, 1), lambda i: (i, 0)),
        ),
        compiler_params=pltpu.CompilerParams(
            dimension_semantics=("parallel",),
            vmem_limit_bytes=32 * 1024 * 1024,
        ),
    )(x2)

    return out.reshape(N, C, 1, 1)


def gem_reference(x, p=3.0, eps=1e-6):
    """Pure-JAX reference mirroring the PyTorch forward."""
    xf = x.astype(jnp.float32)
    xc = jnp.maximum(xf, eps)
    m = jnp.mean(xc ** p, axis=(-2, -1), keepdims=True)
    return m ** (1.0 / p)


if __name__ == "__main__":
    p, eps = 3.0, 1e-6

    # Main shape consistent with the module: batch=2, channels=4, 16x16 spatial.
    x = jax.random.normal(jax.random.PRNGKey(0), (2, 4, 16, 16), jnp.float32)
    out = jax.block_until_ready(gem_pallas(x, p=p, eps=eps))
    ref = jax.block_until_ready(gem_reference(x, p=p, eps=eps))
    assert out.shape == (2, 4, 1, 1), out.shape
    np.testing.assert_allclose(np.asarray(out), np.asarray(ref), rtol=1e-4, atol=1e-5)

    # Multi-tile + ragged-last-tile path (R = 120 rows -> 2 tiles of 64, no host pad).
    x2 = jax.random.normal(jax.random.PRNGKey(1), (3, 40, 16, 16), jnp.float32)
    out2 = jax.block_until_ready(gem_pallas(x2, p=p, eps=eps))
    ref2 = gem_reference(x2, p=p, eps=eps)
    assert out2.shape == (3, 40, 1, 1), out2.shape
    np.testing.assert_allclose(np.asarray(out2), np.asarray(ref2), rtol=1e-4, atol=1e-5)

    # bf16 ingestion path (half the HBM bytes; upcast happens in-kernel).
    xb = x.astype(jnp.bfloat16)
    outb = jax.block_until_ready(gem_pallas(xb, p=p, eps=eps))
    refb = gem_reference(xb, p=p, eps=eps)
    np.testing.assert_allclose(np.asarray(outb).astype(np.float32),
                               np.asarray(refb), rtol=2e-2, atol=2e-2)

    print("KERNEL_OK")
</pallas_src>

<mosaic_0001>
module attributes {stable_mosaic.version = 11 : i64} {
  func.func @gem_kernel(%arg0: i32, %arg1: memref<8x256xf32, #tpu.memory_space<vmem>>, %arg2: memref<8x1xf32, #tpu.memory_space<vmem>>) attributes {dimension_semantics = [#tpu.dimension_semantics<parallel>], iteration_bounds = array<i64: 1>, scalar_prefetch = 0 : i64, scratch_operands = 0 : i64, tpu.core_type = #tpu.core_type<tc>, window_params = [{transform_indices = @transform_0, window_bounds = array<i64: 8, 256>}, {transform_indices = @transform_1, window_bounds = array<i64: 8, 1>}]} {
    %c0 = arith.constant 0 : index
    %c0_0 = arith.constant 0 : index
    %0 = vector.load %arg1[%c0, %c0_0] : memref<8x256xf32, #tpu.memory_space<vmem>>, vector<8x256xf32>
    %cst = arith.constant 9.99999997E-7 : f32
    %1 = vector.broadcast %cst : f32 to vector<8x256xf32>
    %2 = arith.maximumf %0, %1 : vector<8x256xf32>
    %3 = arith.mulf %2, %2 : vector<8x256xf32>
    %4 = arith.mulf %2, %3 : vector<8x256xf32>
    %cst_1 = arith.constant dense<0.000000e+00> : vector<8xf32>
    %5 = vector.multi_reduction <add>, %4, %cst_1 [1] : vector<8x256xf32> to vector<8xf32>
    %6 = vector.shape_cast %5 : vector<8xf32> to vector<8x1xf32>
    %cst_2 = arith.constant 3.906250e-03 : f32
    %7 = vector.broadcast %cst_2 : f32 to vector<8x1xf32>
    %8 = arith.mulf %6, %7 : vector<8x1xf32>
    %9 = math.log %8 : vector<8x1xf32>
    %cst_3 = arith.constant 0.333333343 : f32
    %10 = vector.broadcast %cst_3 : f32 to vector<8x1xf32>
    %11 = arith.mulf %10, %9 : vector<8x1xf32>
    %12 = math.exp %11 : vector<8x1xf32>
    %c0_4 = arith.constant 0 : index
    %c0_5 = arith.constant 0 : index
    %13 = vector.load %arg2[%c0_4, %c0_5] : memref<8x1xf32, #tpu.memory_space<vmem>>, vector<8x1xf32>
    tpu.vector_store %arg2[%c0_4, %c0_5], %12 {strides = array<i32>} : memref<8x1xf32, #tpu.memory_space<vmem>>, vector<8x1xf32>,
    return
  }
  func.func @transform_0(%arg0: i32) -> (i32, i32) {
    %c0_i32 = arith.constant 0 : i32
    %c0_i32_0 = arith.constant 0 : i32
    return %arg0, %c0_i32 : i32, i32
  }
  func.func @transform_1(%arg0: i32) -> (i32, i32) {
    %c0_i32 = arith.constant 0 : i32
    %c0_i32_0 = arith.constant 0 : i32
    return %arg0, %c0_i32 : i32, i32
  }
}

</mosaic_0001>

<llo_original>
// kernel: tpu_custom_call.1
$region0: #{tpu_custom_call.1}
  #allocation0 [shape = 'u32[]', space=smem, size = 0x4, offset = 0x4, fixed_abs, tag = 'smem constant byte address 0x4 - core index']
  #allocation1 [shape = 'u32[144,128]{1,0:T(1,128)}', space=vmem, size = 0x12000, scoped, tag = 'internal scratch']
  %s0 = inlined_call_operand.hbm [shape: f32[8,256], index: 0, kind: input, shape index: {}]
  %s1 = inlined_call_operand.vmem [shape: f32[8,1], index: 1, kind: output, shape index: {}]
  %s2 = sld [smem:[#allocation0]]
  $region18: #{tpu_custom_call.1} parent=0
    _
  %s4 = ssub.s32 1, %s2
  %s5 = scalar_select 0, %s4, %s2
  $region1: #{tpu_custom_call.1} parent=0
    #allocation2 [shape = 'u8[8192]{0}', space=vmem, size = 0x2000, scoped, tag = 'input window, operand 0, single buffered']
    #allocation3 [shape = 's32[1]{0}', space=sflag, size = 0x4, scoped, tag = 'scoped memory for tpu_custom_call.1']
    %6 = vsyncpa [#allocation3], 0
    // Predicated region
    $region2: #{tpu_custom_call.1} parent=1 // pred_check
      _
    $region3: #{tpu_custom_call.1} parent=1 // pred_check_branch
      %8 = sbr.rel (0) target = $region5
    $region4: #{tpu_custom_call.1} parent=1 // pred_region
      %s10 = ssub.s32 256, 256
      %11 = vsyncadd [#allocation3], %s10
      %s13 = sshll.u32 [#allocation2], 4
      %s14 = int_to_ptr.vmem [resolvable:$true] %s13
      %16 = dma.hbm_to_vmem [thread:$0]  %s0, 256, %s14, [#allocation3]
    $region5: #{tpu_custom_call.1} parent=1 // pred_fallthru
      _
    // Predicated region
    $region6: #{tpu_custom_call.1} parent=1 // pred_check
      _
    $region7: #{tpu_custom_call.1} parent=1 // pred_check_branch
      %18 = sbr.rel (0) target = $region9
    $region8: #{tpu_custom_call.1} parent=1 // pred_region
      %19 = dma.done [#allocation3], 256
    $region9: #{tpu_custom_call.1} parent=1 // pred_fallthru
      _
    %v20 = vld [vmem:[#allocation2] sm:$0xff]
    %v21 = vld [vmem:[#allocation2 + $0x8] sm:$0xff]
    %v22 = vmax.f32 %v20, 1e-06
    %v23 = vmax.f32 %v21, 1e-06
    %v24 = vmul.f32 %v22, %v22
    %v25 = vmul.f32 %v23, %v23
    %v26 = vmul.f32 %v22, %v24
    %v27 = vmul.f32 %v23, %v25
    %v28 = vadd.f32 %v26, %v27
    %29 = vadd.xlane.f32.xlu0 %v28
    %v30 = vpop.xlane.xlu0 %29
    %v31 = vmul.f32 %v30, 0.00390625
    %v32 = vlog2.pop %v31
    %v33 = vmul.f32 %v32, 0.6931472
    %v34 = vmul.f32 %v33, 0.33333334
    %v35 = vmul.f32 %v34, 1.442695
    %v36 = vpow.pop %v35
    %vm37 = vcmask 7168
    %38 = vst.msk [vmem:[%s1] sm:$0xff] %vm37, %v36
    // Predicated region
    $region10: #{tpu_custom_call.1} parent=1 // pred_check
      _
    $region11: #{tpu_custom_call.1} parent=1 // pred_check_branch
      %40 = sbr.rel (0) target = $region13
    $region12: #{tpu_custom_call.1} parent=1 // pred_region
      _
    $region13: #{tpu_custom_call.1} parent=1 // pred_fallthru
      _
    // Predicated region
    $region14: #{tpu_custom_call.1} parent=1 // pred_check
      _
    $region15: #{tpu_custom_call.1} parent=1 // pred_check_branch
      %42 = sbr.rel (0) target = $region17
    $region16: #{tpu_custom_call.1} parent=1 // pred_region
      _
    $region17: #{tpu_custom_call.1} parent=1 // pred_fallthru
      _
    %43 = vsyncpa [#allocation3], 1

</llo_original>
